<compile_context>
chip_gen: v5e
topology: v5e:2x2
jax: 0.10.0
libtpu: 0.0.40
codegen_flags: <defaults>
</compile_context>

<pallas_src>
import functools

import jax
import jax.numpy as jnp
from jax.experimental import pallas as pl
from jax.experimental.pallas import tpu as pltpu


# ----------------------------------------------------------------------------
# Fused vocoder kernel (one grid step per batch element)
# ----------------------------------------------------------------------------
def _fused_vocoder_kernel(t_valid, zq_ref, cond_ref, wpre_ref, wup_ref, wwav_ref,
                          bias_ref, o_ref, xcpad_ref, hpad_ref):
    f32 = jnp.float32
    bf16 = jnp.bfloat16
    T = o_ref.shape[2]            # lane-padded frame count (multiple of 128)
    D = wpre_ref.shape[0]

    zq = zq_ref[0]                            # (D, T+2) bf16, zero time-halo of 1
    cond = cond_ref[0]                        # (D, 2) f32
    cpre = cond[:, 0:1]                       # prenet-internal condition column
    dvec = cond[:, 1:2]                       # d_vector column (wrapper add)
    bpre = bias_ref[0:D, 0:1]                 # prenet conv bias        (D, 1)
    bup = bias_ref[:, 1:2]                    # up-conv bias, stacked   (2D, 1)
    bwav = bias_ref[0:1, 2:3]                 # out-conv bias           (1, 1)

    # --- prenet: Conv1d(D->D, k=3, pad=1) as ONE (D,3D)@(3D,T) MXU matmul
    slab_pre = jnp.concatenate(
        [zq[:, 0:T], zq[:, 1:T + 1], zq[:, 2:T + 2]], axis=0)             # (3D, T) bf16
    acc = jnp.dot(wpre_ref[...], slab_pre, preferred_element_type=f32)    # (D, T) f32
    xc = jnp.tanh(acc + bpre + cpre) + dvec   # prenet output + d_vector (wrapper add)

    if t_valid < T:
        # Zero the lane-padding tail so it cannot bleed into valid frames
        # through the conv halos of the following stages.
        lane = jax.lax.broadcasted_iota(jnp.int32, (D, T), 1)
        xc = jnp.where(lane < t_valid, xc, 0.0)

    # bf16 padded x_conditioned scratch; zero ONLY the two halo columns
    # (interior fully overwritten every step, halos re-zeroed every step).
    xcpad_ref[:, 0:1] = jnp.zeros((D, 1), bf16)
    xcpad_ref[:, T + 1:T + 2] = jnp.zeros((D, 1), bf16)
    xcpad_ref[:, 1:T + 1] = xc.astype(bf16)

    # --- decoder stage 1: ConvTranspose1d(D->D, k=4, s=2, p=1), polyphase:
    #     even[m] = x[m-1]@W0 + x[m]@W2 ; odd[m] = x[m]@W1 + x[m+1]@W3
    #     Both phases from ONE (2D,3D)@(3D,T) matmul on a single 3-tap slab.
    slab_up = jnp.concatenate(
        [xcpad_ref[:, 0:T], xcpad_ref[:, 1:T + 1], xcpad_ref[:, 2:T + 2]],
        axis=0)                                                            # (3D, T) bf16
    h = jnp.dot(wup_ref[...], slab_up, preferred_element_type=f32) + bup   # (2D, T) f32
    # TODO(synk): leaky slope 0.1 matches the synthetic reference decoder; torch
    #             default negative_slope is 0.01 — adjust when loading real weights.
    h = jnp.where(h >= 0, h, 0.1 * h)

    if t_valid < T:
        lane2 = jax.lax.broadcasted_iota(jnp.int32, (2 * D, T), 1)
        h = jnp.where(lane2 < t_valid, h, 0.0)

    # bf16 padded even/odd phase scratch (even rows 0:D, odd rows D:2D);
    # halo-only zeroing (2 columns on each side).
    hpad_ref[:, 0:2] = jnp.zeros((2 * D, 2), bf16)
    hpad_ref[:, T + 2:T + 4] = jnp.zeros((2 * D, 2), bf16)
    hpad_ref[:, 2:T + 2] = h.astype(bf16)

    # --- decoder stage 2: Conv1d(D->1, k=7, pad=3) over the interleaved signal,
    #     decomposed over even/odd output phases so the interleave never
    #     materializes.  One (2, 8D) @ (8D, T) matmul, lane-dense (2, T) output.
    #     Slab order: [e(-1), e(0), e(+1), e(+2), o(-2), o(-1), o(0), o(+1)].
    slab_w = jnp.concatenate(
        [hpad_ref[0:D, 1:T + 1], hpad_ref[0:D, 2:T + 2],
         hpad_ref[0:D, 3:T + 3], hpad_ref[0:D, 4:T + 4],
         hpad_ref[D:2 * D, 0:T], hpad_ref[D:2 * D, 1:T + 1],
         hpad_ref[D:2 * D, 2:T + 2], hpad_ref[D:2 * D, 3:T + 3]],
        axis=0)                                                            # (8D, T) bf16
    wav = jnp.dot(wwav_ref[...], slab_w, preferred_element_type=f32) + bwav  # (2, T)
    o_ref[0] = jnp.tanh(wav)


def fused_vocoder_pallas(zqT_pad, cond, wpre, wup, wwav, bias, *, t_valid):
    B, D, Tp2 = zqT_pad.shape
    T = Tp2 - 2                               # lane-padded frame count
    b3 = lambda b: (b, 0, 0)
    c2 = lambda b: (0, 0)
    kernel = functools.partial(_fused_vocoder_kernel, t_valid)
    return pl.pallas_call(
        kernel,
        out_shape=jax.ShapeDtypeStruct((B, 2, T), jnp.float32),
        grid=(B,),
        in_specs=[
            pl.BlockSpec((1, D, Tp2), b3),     # z_q^T, bf16, time halo 1 + lane pad
            pl.BlockSpec((1, D, 2), b3),       # [cond_pre | d_vector] per-batch columns
            pl.BlockSpec((D, 3 * D), c2),      # prenet conv weights (bf16, im2col-stacked)
            pl.BlockSpec((2 * D, 3 * D), c2),  # merged even/odd up-conv weights (bf16)
            pl.BlockSpec((2, 8 * D), c2),      # out-conv phase-decomposed weights (bf16)
            pl.BlockSpec((2 * D, 3), c2),      # packed biases [bpre | bup;bup | bwav]
        ],
        out_specs=pl.BlockSpec((1, 2, T), b3),
        scratch_shapes=[
            pltpu.VMEM((D, T + 2), jnp.bfloat16),      # padded x_conditioned (bf16)
            pltpu.VMEM((2 * D, T + 4), jnp.bfloat16),  # padded even/odd up-conv phases
        ],
        compiler_params=pltpu.CompilerParams(
            dimension_semantics=("parallel",),
            vmem_limit_bytes=48 * 1024 * 1024,   # fits v5e/v6e/v7x scoped VMEM
        ),
    )(zqT_pad, cond, wpre, wup, wwav, bias)


# ----------------------------------------------------------------------------
# One-time weight packing (transpose / im2col-stack / bf16 cast) — hoisted out
# of the per-call forward.
# ----------------------------------------------------------------------------
def pack_vocoder_weights(params):
    bf16 = jnp.bfloat16
    wpre = params["prenet_conv_w"]            # (3, Din, Dout)
    D = wpre.shape[2]

    a_pre = jnp.concatenate([wpre[0].T, wpre[1].T, wpre[2].T], axis=1).astype(bf16)   # (D, 3D)

    wup = params["up_conv_w"]                 # (4, Din, Dout)
    zdd = jnp.zeros((D, D), jnp.float32)
    # merged up-conv acting on the 3-tap slab [x[m-1]; x[m]; x[m+1]]:
    #   even rows: [W0ᵀ, W2ᵀ, 0] ; odd rows: [0, W1ᵀ, W3ᵀ]
    row_even = jnp.concatenate([wup[0].T, wup[2].T, zdd], axis=1)          # (D, 3D)
    row_odd = jnp.concatenate([zdd, wup[1].T, wup[3].T], axis=1)           # (D, 3D)
    a_up = jnp.concatenate([row_even, row_odd], axis=0).astype(bf16)       # (2D, 3D)

    w7 = params["out_conv_w"][:, :, 0]        # (7, D)
    zd = jnp.zeros((D,), jnp.float32)
    # slab order in-kernel: [e(-1), e(0), e(+1), e(+2), o(-2), o(-1), o(0), o(+1)]
    r_even = jnp.concatenate([w7[1], w7[3], w7[5], zd, w7[0], w7[2], w7[4], w7[6]])
    r_odd = jnp.concatenate([w7[0], w7[2], w7[4], w7[6], zd, w7[1], w7[3], w7[5]])
    a_wav = jnp.stack([r_even, r_odd], axis=0).astype(bf16)                # (2, 8D)

    # packed bias: col0 rows 0:D = prenet bias, col1 = [bup; bup], [0,2] = bwav
    bias = jnp.zeros((2 * D, 3), jnp.float32)
    bias = bias.at[0:D, 0].set(params["prenet_conv_b"].reshape(D))
    bias = bias.at[0:D, 1].set(params["up_conv_b"].reshape(D))
    bias = bias.at[D:2 * D, 1].set(params["up_conv_b"].reshape(D))
    bias = bias.at[0, 2].set(params["out_conv_b"][0, 0])

    return {"wpre": a_pre, "wup": a_up, "wwav": a_wav, "bias": bias}


# ----------------------------------------------------------------------------
# Model: deterministic synthetic parameters + forward
# ----------------------------------------------------------------------------
def make_params(key, *, codebook_size=64, n_quant_global=2, d_model=32, d_spk=16):
    ks = jax.random.split(key, 10)
    s = 0.1
    return {
        "sem_codebook": s * jax.random.normal(ks[0], (codebook_size, d_model), jnp.float32),
        "spk_codebooks": s * jax.random.normal(ks[1], (n_quant_global, codebook_size, d_spk), jnp.float32),
        "spk_proj_w": s * jax.random.normal(ks[2], (d_spk, d_model), jnp.float32),
        "spk_proj_b": s * jax.random.normal(ks[3], (1, d_model), jnp.float32),
        "prenet_cond_w": s * jax.random.normal(ks[4], (d_model, d_model), jnp.float32),
        "prenet_cond_b": s * jax.random.normal(ks[5], (1, d_model), jnp.float32),
        # conv weights stored channels-last: (K, Cin, Cout)
        "prenet_conv_w": s * jax.random.normal(ks[6], (3, d_model, d_model), jnp.float32),
        "prenet_conv_b": jnp.zeros((1, d_model), jnp.float32),
        # ConvTranspose1d(k=4, s=2, p=1) in equivalent zero-insert-conv form
        "up_conv_w": s * jax.random.normal(ks[7], (4, d_model, d_model), jnp.float32),
        "up_conv_b": jnp.zeros((1, d_model), jnp.float32),
        "out_conv_w": s * jax.random.normal(ks[8], (7, d_model, 1), jnp.float32),
        "out_conv_b": jnp.zeros((1, 1), jnp.float32),
    }


def bicodec_vocoder_forward(params, packed, semantic_tokens, global_tokens):
    """semantic_tokens: (B, T_sem) int32; global_tokens: (B, Nq, Tg) int32
       returns waveform (B, 1, 2*T_sem) float32 (torch NCW layout)."""
    # --- quantizer.detokenize: codebook lookup (XLA gather; no Pallas equivalent)
    z_q = jnp.take(params["sem_codebook"], semantic_tokens, axis=0)        # (B, T, D)

    # --- speaker_encoder.detokenize: RVQ sum + mean pool + tiny linears (XLA)
    spk_emb = 0.0
    for q in range(params["spk_codebooks"].shape[0]):
        spk_emb = spk_emb + jnp.take(params["spk_codebooks"][q],
                                     global_tokens[:, q, :], axis=0)       # (B, Tg, Dspk)
    spk_pooled = jnp.mean(spk_emb, axis=1)                                 # (B, Dspk)
    d_vector = spk_pooled @ params["spk_proj_w"] + params["spk_proj_b"]    # (B, D)
    cond_pre = d_vector @ params["prenet_cond_w"] + params["prenet_cond_b"]  # (B, D)

    # --- fused prenet + conditioning-add + decoder (single Pallas kernel)
    B, T, D = z_q.shape
    T_pad = ((T + 127) // 128) * 128          # lane-dense time axis for the kernel
    zqT = jnp.transpose(z_q, (0, 2, 1)).astype(jnp.bfloat16)               # (B, D, T) bf16
    zqT_pad = jnp.pad(zqT, ((0, 0), (0, 0), (1, 1 + T_pad - T)))           # (B, D, T_pad+2)
    cond = jnp.stack([cond_pre, d_vector], axis=-1)                        # (B, D, 2)

    phases = fused_vocoder_pallas(zqT_pad, cond,
                                  packed["wpre"], packed["wup"],
                                  packed["wwav"], packed["bias"],
                                  t_valid=T)                               # (B, 2, T_pad)
    phases = phases[:, :, :T]

    # interleave even/odd output phases -> (B, 1, 2T) waveform (torch layout)
    wav = jnp.transpose(phases, (0, 2, 1)).reshape(B, 1, 2 * T)
    return wav


# ----------------------------------------------------------------------------
# Pure-JAX f32 reference (original unfused formulation) for validation
# ----------------------------------------------------------------------------
def bicodec_vocoder_reference(params, semantic_tokens, global_tokens):
    z_q = jnp.take(params["sem_codebook"], semantic_tokens, axis=0)
    spk_emb = 0.0
    for q in range(params["spk_codebooks"].shape[0]):
        spk_emb = spk_emb + jnp.take(params["spk_codebooks"][q],
                                     global_tokens[:, q, :], axis=0)
    spk_pooled = jnp.mean(spk_emb, axis=1)
    d_vector = spk_pooled @ params["spk_proj_w"] + params["spk_proj_b"]
    cond_pre = d_vector @ params["prenet_cond_w"] + params["prenet_cond_b"]

    def conv1d(x_pad, w, b):          # channels-last, stride 1
        K = w.shape[0]
        T_out = x_pad.shape[1] - K + 1
        acc = 0.0
        for k in range(K):
            acc = acc + jnp.einsum("btc,cd->btd", x_pad[:, k:k + T_out, :], w[k])
        return acc + b

    z_q_pad = jnp.pad(z_q, ((0, 0), (1, 1), (0, 0)))
    x_pre = jnp.tanh(conv1d(z_q_pad, params["prenet_conv_w"], params["prenet_conv_b"])
                     + cond_pre[:, None, :])
    x_cond = x_pre + d_vector[:, None, :]

    B, T, D = x_cond.shape
    x_up = jnp.zeros((B, 2 * T - 1, D), jnp.float32).at[:, ::2, :].set(x_cond)
    x_up = jnp.pad(x_up, ((0, 0), (2, 2), (0, 0)))
    h = conv1d(x_up, params["up_conv_w"], params["up_conv_b"])
    h = jnp.where(h >= 0, h, 0.1 * h)
    h_pad = jnp.pad(h, ((0, 0), (3, 3), (0, 0)))
    wav = jnp.tanh(conv1d(h_pad, params["out_conv_w"], params["out_conv_b"]))
    return jnp.transpose(wav, (0, 2, 1))


# ----------------------------------------------------------------------------
if __name__ == "__main__":
    key = jax.random.PRNGKey(0)
    k_params, k_sem, k_glob = jax.random.split(key, 3)

    B = 2
    T_SEM = 8
    N_QUANT_GLOBAL = 2
    T_GLOBAL = 4
    CODEBOOK = 64

    params = make_params(k_params, codebook_size=CODEBOOK,
                         n_quant_global=N_QUANT_GLOBAL, d_model=32, d_spk=16)

    # one-time bf16 weight packing (hoisted out of the per-call forward)
    packed = jax.tree.map(jax.block_until_ready, pack_vocoder_weights(params))

    semantic_tokens = jax.random.randint(k_sem, (B, T_SEM), 0, CODEBOOK, jnp.int32)
    global_tokens = jax.random.randint(k_glob, (B, N_QUANT_GLOBAL, T_GLOBAL), 0,
                                       CODEBOOK, jnp.int32)

    fwd = jax.jit(bicodec_vocoder_forward)
    wav = jax.block_until_ready(fwd(params, packed, semantic_tokens, global_tokens))

    assert wav.shape == (B, 1, 2 * T_SEM), wav.shape
    assert wav.dtype == jnp.float32

    wav_ref = jax.block_until_ready(
        jax.jit(bicodec_vocoder_reference)(params, semantic_tokens, global_tokens))
    max_err = float(jnp.max(jnp.abs(wav - wav_ref)))
    assert max_err < 2e-2, f"mismatch vs f32 reference: {max_err}"

    print("KERNEL_OK")
</pallas_src>

<mosaic_0001>
module attributes {stable_mosaic.version = 11 : i64} {
  func.func @_fused_vocoder_kernel(%arg0: i32, %arg1: memref<1x32x130xbf16, #tpu.memory_space<vmem>>, %arg2: memref<1x32x2xf32, #tpu.memory_space<vmem>>, %arg3: memref<32x96xbf16, #tpu.memory_space<vmem>>, %arg4: memref<64x96xbf16, #tpu.memory_space<vmem>>, %arg5: memref<2x256xbf16, #tpu.memory_space<vmem>>, %arg6: memref<64x3xf32, #tpu.memory_space<vmem>>, %arg7: memref<1x2x128xf32, #tpu.memory_space<vmem>>, %arg8: memref<32x130xbf16, #tpu.memory_space<vmem>>, %arg9: memref<64x132xbf16, #tpu.memory_space<vmem>>) attributes {dimension_semantics = [#tpu.dimension_semantics<parallel>], iteration_bounds = array<i64: 2>, scalar_prefetch = 0 : i64, scratch_operands = 2 : i64, tpu.core_type = #tpu.core_type<tc>, window_params = [{transform_indices = @transform_0, window_bounds = array<i64: 1, 32, 130>}, {transform_indices = @transform_1, window_bounds = array<i64: 1, 32, 2>}, {pipeline_mode = #tpu.pipeline_mode<synchronous>, transform_indices = @transform_2, window_bounds = array<i64: 32, 96>}, {pipeline_mode = #tpu.pipeline_mode<synchronous>, transform_indices = @transform_3, window_bounds = array<i64: 64, 96>}, {pipeline_mode = #tpu.pipeline_mode<synchronous>, transform_indices = @transform_4, window_bounds = array<i64: 2, 256>}, {pipeline_mode = #tpu.pipeline_mode<synchronous>, transform_indices = @transform_5, window_bounds = array<i64: 64, 3>}, {transform_indices = @transform_6, window_bounds = array<i64: 1, 2, 128>}]} {
    %c0 = arith.constant 0 : index
    %c0_0 = arith.constant 0 : index
    %c0_1 = arith.constant 0 : index
    %0 = vector.load %arg1[%c0, %c0_0, %c0_1] : memref<1x32x130xbf16, #tpu.memory_space<vmem>>, vector<1x32x130xbf16>
    %1 = vector.shape_cast %0 : vector<1x32x130xbf16> to vector<32x130xbf16>
    %c0_2 = arith.constant 0 : index
    %c0_3 = arith.constant 0 : index
    %c0_4 = arith.constant 0 : index
    %2 = vector.load %arg2[%c0_2, %c0_3, %c0_4] : memref<1x32x2xf32, #tpu.memory_space<vmem>>, vector<1x32x2xf32>
    %3 = vector.shape_cast %2 : vector<1x32x2xf32> to vector<32x2xf32>
    %4 = vector.extract_strided_slice %3 {offsets = [0, 0], sizes = [32, 1], strides = [1, 1]} : vector<32x2xf32> to vector<32x1xf32>
    %5 = vector.extract_strided_slice %3 {offsets = [0, 1], sizes = [32, 1], strides = [1, 1]} : vector<32x2xf32> to vector<32x1xf32>
    %c0_5 = arith.constant 0 : index
    %c0_6 = arith.constant 0 : index
    %6 = vector.load %arg6[%c0_5, %c0_6] : memref<64x3xf32, #tpu.memory_space<vmem>>, vector<32x1xf32>
    %c0_7 = arith.constant 0 : index
    %c1 = arith.constant 1 : index
    %7 = vector.load %arg6[%c0_7, %c1] : memref<64x3xf32, #tpu.memory_space<vmem>>, vector<64x1xf32>
    %c0_8 = arith.constant 0 : index
    %c2 = arith.constant 2 : index
    %8 = vector.load %arg6[%c0_8, %c2] : memref<64x3xf32, #tpu.memory_space<vmem>>, vector<1x1xf32>
    %9 = vector.extract_strided_slice %1 {offsets = [0, 0], sizes = [32, 128], strides = [1, 1]} : vector<32x130xbf16> to vector<32x128xbf16>
    %10 = vector.extract_strided_slice %1 {offsets = [0, 1], sizes = [32, 128], strides = [1, 1]} : vector<32x130xbf16> to vector<32x128xbf16>
    %11 = vector.extract_strided_slice %1 {offsets = [0, 2], sizes = [32, 128], strides = [1, 1]} : vector<32x130xbf16> to vector<32x128xbf16>
    %12 = tpu.concatenate %9, %10, %11 in 0 : vector<32x128xbf16>, vector<32x128xbf16>, vector<32x128xbf16> -> vector<96x128xbf16>
    %c0_9 = arith.constant 0 : index
    %c0_10 = arith.constant 0 : index
    %13 = vector.load %arg3[%c0_9, %c0_10] : memref<32x96xbf16, #tpu.memory_space<vmem>>, vector<32x96xbf16>
    %cst = arith.constant dense<0.000000e+00> : vector<32x128xf32>
    %14 = tpu.matmul %13, %12, %cst {dimension_numbers = #tpu.dot_dimension_numbers<[1], [0], [0], [1], [0, 0, 1, 1], [], []>} : vector<32x96xbf16>, vector<96x128xbf16>, vector<32x128xf32> -> vector<32x128xf32>
    %15 = vector.broadcast %6 : vector<32x1xf32> to vector<32x128xf32>
    %16 = arith.addf %14, %15 : vector<32x128xf32>
    %17 = vector.broadcast %4 : vector<32x1xf32> to vector<32x128xf32>
    %18 = arith.addf %16, %17 : vector<32x128xf32>
    %19 = math.tanh %18 : vector<32x128xf32>
    %20 = vector.broadcast %5 : vector<32x1xf32> to vector<32x128xf32>
    %21 = arith.addf %19, %20 : vector<32x128xf32>
    %22 = tpu.iota {dimensions = array<i32: 1>} : vector<32x128xi32>
    %c8_i32 = arith.constant 8 : i32
    %23 = vector.broadcast %c8_i32 : i32 to vector<32x128xi32>
    %24 = arith.cmpi slt, %22, %23 : vector<32x128xi32>
    %cst_11 = arith.constant 0.000000e+00 : f32
    %25 = vector.broadcast %cst_11 : f32 to vector<32x128xf32>
    %26 = arith.select %24, %21, %25 : vector<32x128xi1>, vector<32x128xf32>
    %cst_12 = arith.constant 0.000000e+00 : bf16
    %27 = vector.broadcast %cst_12 : bf16 to vector<32x1xbf16>
    %c0_13 = arith.constant 0 : index
    %c0_14 = arith.constant 0 : index
    %28 = vector.load %arg8[%c0_13, %c0_14] : memref<32x130xbf16, #tpu.memory_space<vmem>>, vector<32x1xbf16>
    tpu.vector_store %arg8[%c0_13, %c0_14], %27 {strides = array<i32>} : memref<32x130xbf16, #tpu.memory_space<vmem>>, vector<32x1xbf16>,
    %cst_15 = arith.constant 0.000000e+00 : bf16
    %29 = vector.broadcast %cst_15 : bf16 to vector<32x1xbf16>
    %c0_16 = arith.constant 0 : index
    %c129 = arith.constant 129 : index
    %30 = vector.load %arg8[%c0_16, %c129] : memref<32x130xbf16, #tpu.memory_space<vmem>>, vector<32x1xbf16>
    tpu.vector_store %arg8[%c0_16, %c129], %29 {strides = array<i32>} : memref<32x130xbf16, #tpu.memory_space<vmem>>, vector<32x1xbf16>,
    %31 = arith.truncf %26 : vector<32x128xf32> to vector<32x128xbf16>
    %c0_17 = arith.constant 0 : index
    %c1_18 = arith.constant 1 : index
    %32 = vector.load %arg8[%c0_17, %c1_18] : memref<32x130xbf16, #tpu.memory_space<vmem>>, vector<32x128xbf16>
    tpu.vector_store %arg8[%c0_17, %c1_18], %31 {strides = array<i32>} : memref<32x130xbf16, #tpu.memory_space<vmem>>, vector<32x128xbf16>,
    %c0_19 = arith.constant 0 : index
    %c0_20 = arith.constant 0 : index
    %33 = vector.load %arg8[%c0_19, %c0_20] : memref<32x130xbf16, #tpu.memory_space<vmem>>, vector<32x128xbf16>
    %c0_21 = arith.constant 0 : index
    %c1_22 = arith.constant 1 : index
    %34 = vector.load %arg8[%c0_21, %c1_22] : memref<32x130xbf16, #tpu.memory_space<vmem>>, vector<32x128xbf16>
    %c0_23 = arith.constant 0 : index
    %c2_24 = arith.constant 2 : index
    %35 = vector.load %arg8[%c0_23, %c2_24] : memref<32x130xbf16, #tpu.memory_space<vmem>>, vector<32x128xbf16>
    %36 = tpu.concatenate %33, %34, %35 in 0 : vector<32x128xbf16>, vector<32x128xbf16>, vector<32x128xbf16> -> vector<96x128xbf16>
    %c0_25 = arith.constant 0 : index
    %c0_26 = arith.constant 0 : index
    %37 = vector.load %arg4[%c0_25, %c0_26] : memref<64x96xbf16, #tpu.memory_space<vmem>>, vector<64x96xbf16>
    %cst_27 = arith.constant dense<0.000000e+00> : vector<64x128xf32>
    %38 = tpu.matmul %37, %36, %cst_27 {dimension_numbers = #tpu.dot_dimension_numbers<[1], [0], [0], [1], [0, 0, 1, 1], [], []>} : vector<64x96xbf16>, vector<96x128xbf16>, vector<64x128xf32> -> vector<64x128xf32>
    %39 = vector.broadcast %7 : vector<64x1xf32> to vector<64x128xf32>
    %40 = arith.addf %38, %39 : vector<64x128xf32>
    %cst_28 = arith.constant 0.000000e+00 : f32
    %41 = vector.broadcast %cst_28 : f32 to vector<64x128xf32>
    %42 = arith.cmpf oge, %40, %41 : vector<64x128xf32>
    %cst_29 = arith.constant 1.000000e-01 : f32
    %43 = vector.broadcast %cst_29 : f32 to vector<64x128xf32>
    %44 = arith.mulf %43, %40 : vector<64x128xf32>
    %45 = arith.select %42, %40, %44 : vector<64x128xi1>, vector<64x128xf32>
    %46 = tpu.iota {dimensions = array<i32: 1>} : vector<64x128xi32>
    %c8_i32_30 = arith.constant 8 : i32
    %47 = vector.broadcast %c8_i32_30 : i32 to vector<64x128xi32>
    %48 = arith.cmpi slt, %46, %47 : vector<64x128xi32>
    %cst_31 = arith.constant 0.000000e+00 : f32
    %49 = vector.broadcast %cst_31 : f32 to vector<64x128xf32>
    %50 = arith.select %48, %45, %49 : vector<64x128xi1>, vector<64x128xf32>
    %cst_32 = arith.constant 0.000000e+00 : bf16
    %51 = vector.broadcast %cst_32 : bf16 to vector<64x2xbf16>
    %c0_33 = arith.constant 0 : index
    %c0_34 = arith.constant 0 : index
    %52 = vector.load %arg9[%c0_33, %c0_34] : memref<64x132xbf16, #tpu.memory_space<vmem>>, vector<64x2xbf16>
    tpu.vector_store %arg9[%c0_33, %c0_34], %51 {strides = array<i32>} : memref<64x132xbf16, #tpu.memory_space<vmem>>, vector<64x2xbf16>,
    %cst_35 = arith.constant 0.000000e+00 : bf16
    %53 = vector.broadcast %cst_35 : bf16 to vector<64x2xbf16>
    %c0_36 = arith.constant 0 : index
    %c130 = arith.constant 130 : index
    %54 = vector.load %arg9[%c0_36, %c130] : memref<64x132xbf16, #tpu.memory_space<vmem>>, vector<64x2xbf16>
    tpu.vector_store %arg9[%c0_36, %c130], %53 {strides = array<i32>} : memref<64x132xbf16, #tpu.memory_space<vmem>>, vector<64x2xbf16>,
    %55 = arith.truncf %50 : vector<64x128xf32> to vector<64x128xbf16>
    %c0_37 = arith.constant 0 : index
    %c2_38 = arith.constant 2 : index
    %56 = vector.load %arg9[%c0_37, %c2_38] : memref<64x132xbf16, #tpu.memory_space<vmem>>, vector<64x128xbf16>
    tpu.vector_store %arg9[%c0_37, %c2_38], %55 {strides = array<i32>} : memref<64x132xbf16, #tpu.memory_space<vmem>>, vector<64x128xbf16>,
    %c0_39 = arith.constant 0 : index
    %c1_40 = arith.constant 1 : index
    %57 = vector.load %arg9[%c0_39, %c1_40] : memref<64x132xbf16, #tpu.memory_space<vmem>>, vector<32x128xbf16>
    %c0_41 = arith.constant 0 : index
    %c2_42 = arith.constant 2 : index
    %58 = vector.load %arg9[%c0_41, %c2_42] : memref<64x132xbf16, #tpu.memory_space<vmem>>, vector<32x128xbf16>
    %c0_43 = arith.constant 0 : index
    %c3 = arith.constant 3 : index
    %59 = vector.load %arg9[%c0_43, %c3] : memref<64x132xbf16, #tpu.memory_space<vmem>>, vector<32x128xbf16>
    %c0_44 = arith.constant 0 : index
    %c4 = arith.constant 4 : index
    %60 = vector.load %arg9[%c0_44, %c4] : memref<64x132xbf16, #tpu.memory_space<vmem>>, vector<32x128xbf16>
    %c32 = arith.constant 32 : index
    %c0_45 = arith.constant 0 : index
    %61 = vector.load %arg9[%c32, %c0_45] : memref<64x132xbf16, #tpu.memory_space<vmem>>, vector<32x128xbf16>
    %c32_46 = arith.constant 32 : index
    %c1_47 = arith.constant 1 : index
    %62 = vector.load %arg9[%c32_46, %c1_47] : memref<64x132xbf16, #tpu.memory_space<vmem>>, vector<32x128xbf16>
    %c32_48 = arith.constant 32 : index
    %c2_49 = arith.constant 2 : index
    %63 = vector.load %arg9[%c32_48, %c2_49] : memref<64x132xbf16, #tpu.memory_space<vmem>>, vector<32x128xbf16>
    %c32_50 = arith.constant 32 : index
    %c3_51 = arith.constant 3 : index
    %64 = vector.load %arg9[%c32_50, %c3_51] : memref<64x132xbf16, #tpu.memory_space<vmem>>, vector<32x128xbf16>
    %65 = tpu.concatenate %57, %58, %59, %60, %61, %62, %63, %64 in 0 : vector<32x128xbf16>, vector<32x128xbf16>, vector<32x128xbf16>, vector<32x128xbf16>, vector<32x128xbf16>, vector<32x128xbf16>, vector<32x128xbf16>, vector<32x128xbf16> -> vector<256x128xbf16>
    %c0_52 = arith.constant 0 : index
    %c0_53 = arith.constant 0 : index
    %66 = vector.load %arg5[%c0_52, %c0_53] : memref<2x256xbf16, #tpu.memory_space<vmem>>, vector<2x256xbf16>
    %cst_54 = arith.constant dense<0.000000e+00> : vector<2x128xf32>
    %67 = tpu.matmul %66, %65, %cst_54 {dimension_numbers = #tpu.dot_dimension_numbers<[1], [0], [0], [1], [0, 0, 1, 1], [], []>} : vector<2x256xbf16>, vector<256x128xbf16>, vector<2x128xf32> -> vector<2x128xf32>
    %68 = vector.broadcast %8 : vector<1x1xf32> to vector<2x128xf32>
    %69 = arith.addf %67, %68 : vector<2x128xf32>
    %70 = math.tanh %69 : vector<2x128xf32>
    %c0_55 = arith.constant 0 : index
    %c0_56 = arith.constant 0 : index
    %c0_57 = arith.constant 0 : index
    %71 = vector.load %arg7[%c0_55, %c0_56, %c0_57] : memref<1x2x128xf32, #tpu.memory_space<vmem>>, vector<1x2x128xf32>
    %72 = vector.shape_cast %71 : vector<1x2x128xf32> to vector<2x128xf32>
    %73 = vector.shape_cast %70 : vector<2x128xf32> to vector<1x2x128xf32>
    tpu.vector_store %arg7[%c0_55, %c0_56, %c0_57], %73 {strides = array<i32>} : memref<1x2x128xf32, #tpu.memory_space<vmem>>, vector<1x2x128xf32>,
    return
  }
  func.func @transform_0(%arg0: i32) -> (i32, i32, i32) {
    %c0_i32 = arith.constant 0 : i32
    %c0_i32_0 = arith.constant 0 : i32
    %c0_i32_1 = arith.constant 0 : i32
    return %arg0, %c0_i32, %c0_i32_0 : i32, i32, i32
  }
  func.func @transform_1(%arg0: i32) -> (i32, i32, i32) {
    %c0_i32 = arith.constant 0 : i32
    %c0_i32_0 = arith.constant 0 : i32
    %c0_i32_1 = arith.constant 0 : i32
    return %arg0, %c0_i32, %c0_i32_0 : i32, i32, i32
  }
  func.func @transform_2(%arg0: i32) -> (i32, i32) {
    %c0_i32 = arith.constant 0 : i32
    %c0_i32_0 = arith.constant 0 : i32
    %c0_i32_1 = arith.constant 0 : i32
    return %c0_i32, %c0_i32_0 : i32, i32
  }
  func.func @transform_3(%arg0: i32) -> (i32, i32) {
    %c0_i32 = arith.constant 0 : i32
    %c0_i32_0 = arith.constant 0 : i32
    %c0_i32_1 = arith.constant 0 : i32
    return %c0_i32, %c0_i32_0 : i32, i32
  }
  func.func @transform_4(%arg0: i32) -> (i32, i32) {
    %c0_i32 = arith.constant 0 : i32
    %c0_i32_0 = arith.constant 0 : i32
    %c0_i32_1 = arith.constant 0 : i32
    return %c0_i32, %c0_i32_0 : i32, i32
  }
  func.func @transform_5(%arg0: i32) -> (i32, i32) {
    %c0_i32 = arith.constant 0 : i32
    %c0_i32_0 = arith.constant 0 : i32
    %c0_i32_1 = arith.constant 0 : i32
    return %c0_i32, %c0_i32_0 : i32, i32
  }
  func.func @transform_6(%arg0: i32) -> (i32, i32, i32) {
    %c0_i32 = arith.constant 0 : i32
    %c0_i32_0 = arith.constant 0 : i32
    %c0_i32_1 = arith.constant 0 : i32
    return %arg0, %c0_i32, %c0_i32_0 : i32, i32, i32
  }
}

</mosaic_0001>

<llo_original>
// kernel: bicodec_vocoder_forward.1
$region0: #{bicodec_vocoder_forward.1}
  #allocation0 [shape = 'u32[]', space=smem, size = 0x4, offset = 0x4, fixed_abs, tag = 'smem constant byte address 0x4 - core index']
  #allocation1 [shape = 'u32[72,128]{1,0:T(1,128)}', space=vmem, size = 0x9000, scoped, tag = 'internal scratch']
  #allocation2 [shape = 'bf16[32,130]{1,0:T(8,128)(2,1)}', space=vmem, size = 0x4000, scoped, tag = 'scratch operand']
  #allocation3 [shape = 'bf16[64,132]{1,0:T(8,128)(2,1)}', space=vmem, size = 0x8000, scoped, tag = 'scratch operand']
  %s0 = inlined_call_operand.vmem [shape: bf16[2,32,130], index: 0, kind: input, shape index: {}]
  %s1 = inlined_call_operand.vmem [shape: f32[2,32,2], index: 1, kind: input, shape index: {}]
  %s2 = inlined_call_operand.vmem [shape: bf16[32,96], index: 2, kind: input, shape index: {}]
  %s3 = inlined_call_operand.vmem [shape: bf16[64,96], index: 3, kind: input, shape index: {}]
  %s4 = inlined_call_operand.vmem [shape: bf16[2,256], index: 4, kind: input, shape index: {}]
  %s5 = inlined_call_operand.vmem [shape: f32[64,3], index: 5, kind: input, shape index: {}]
  %s6 = inlined_call_operand.vmem [shape: f32[2,2,128], index: 6, kind: output, shape index: {}]
  %s7 = sld [smem:[#allocation0]]
  $region57: #{bicodec_vocoder_forward.1} parent=0
    _
  %s9 = ssub.s32 1, %s7
  %s10 = scalar_select 0, %s9, %s7
  loop: start=0, step=1, limit=4
  $region2: #{bicodec_vocoder_forward.1} parent=0 // loop_pre_header
    _
  $region3: #{bicodec_vocoder_forward.1} parent=0 // loop_header
    %s12 = sphi 0, %s16
    %p13 = scmp.ge.s32.totalorder %s12, 4
    %s22 = sphi 0, %s24
    %s25 = sphi 0, %s22
    %s26 = sphi 0, %s25
    %s42 = sphi 0, %s26
    %s48 = sphi 0, %s50
    %s51 = sphi 0, %s48
    %s52 = sphi 0, %s51
    %s68 = sphi 0, %s52
    %s72 = sphi 0, %s72
    %s74 = sphi 0, %s72
    %s75 = sphi 0, %s74
    %s89 = sphi 0, %s75
    %s93 = sphi 0, %s93
    %s95 = sphi 0, %s93
    %s96 = sphi 0, %s95
    %s110 = sphi 0, %s96
    %s114 = sphi 0, %s114
    %s116 = sphi 0, %s114
    %s117 = sphi 0, %s116
    %s131 = sphi 0, %s117
    %s135 = sphi 0, %s135
    %s137 = sphi 0, %s135
    %s138 = sphi 0, %s137
    %s152 = sphi 0, %s138
    %s158 = sphi 0, %s160
    %s161 = sphi 0, %s158
    %s162 = sphi 0, %s161
    %s178 = sphi 0, %s162
  $region4: #{bicodec_vocoder_forward.1} parent=0 // loop_header_branch
    %15 = sbr.rel (%p13) target = $region8
  $region5: #{bicodec_vocoder_forward.1} parent=0 // loop_body
    %s17 = ssub.s32 %s12, 1
    %s18 = ssub.s32 %s12, 2
    %s19 = sadd.s32 %s12, 1
    %s20 = ssub.s32 %s12, %s19
    %p21 = scmp.eq.s32.totalorder %s20, 0
    %s23 = sadd.s32 %s22, 1
    %s24 = scalar_select %p21, %s22, %s23
    %p27 = pneg %p21
    %p28 = scmp.eq.s32.totalorder %s12, 1
    %p29 = por %p27, %p28
    %p30 = scmp.ne.s32.totalorder %s22, %s25
    %p31 = scmp.eq.s32.totalorder %s12, 0
    %p32 = por %p30, %p31
    %p33 = scmp.ne.s32.totalorder %s22, %s25
    %p34 = scmp.eq.s32.totalorder %s17, 1
    %p35 = por %p33, %p34
    %p36 = scmp.ne.s32.totalorder %s25, %s26
    %p37 = scmp.eq.s32.totalorder %s17, 0
    %p38 = por %p36, %p37
    %p39 = scmp.ne.s32.totalorder %s25, %s26
    %p40 = scmp.eq.s32.totalorder %s18, 1
    %p41 = por %p39, %p40
    %p43 = scmp.ne.s32.totalorder %s26, %s42
    %p44 = scmp.eq.s32.totalorder %s18, 0
    %p45 = por %p43, %p44
    %s46 = ssub.s32 %s12, %s19
    %p47 = scmp.eq.s32.totalorder %s46, 0
    %s49 = sadd.s32 %s48, 1
    %s50 = scalar_select %p47, %s48, %s49
    %p53 = pneg %p47
    %p54 = scmp.eq.s32.totalorder %s12, 1
    %p55 = por %p53, %p54
    %p56 = scmp.ne.s32.totalorder %s48, %s51
    %p57 = scmp.eq.s32.totalorder %s12, 0
    %p58 = por %p56, %p57
    %p59 = scmp.ne.s32.totalorder %s48, %s51
    %p60 = scmp.eq.s32.totalorder %s17, 1
    %p61 = por %p59, %p60
    %p62 = scmp.ne.s32.totalorder %s51, %s52
    %p63 = scmp.eq.s32.totalorder %s17, 0
    %p64 = por %p62, %p63
    %p65 = scmp.ne.s32.totalorder %s51, %s52
    %p66 = scmp.eq.s32.totalorder %s18, 1
    %p67 = por %p65, %p66
    %p69 = scmp.ne.s32.totalorder %s52, %s68
    %p70 = scmp.eq.s32.totalorder %s18, 0
    %p71 = por %p69, %p70
    %s73 = sadd.s32 %s72, 1
    %p76 = scmp.eq.s32.totalorder %s12, 1
    %p77 = scmp.ne.s32.totalorder %s72, %s74
    %p78 = scmp.eq.s32.totalorder %s12, 0
    %p79 = por %p77, %p78
    %p80 = scmp.ne.s32.totalorder %s72, %s74
    %p81 = scmp.eq.s32.totalorder %s17, 1
    %p82 = por %p80, %p81
    %p83 = scmp.ne.s32.totalorder %s74, %s75
    %p84 = scmp.eq.s32.totalorder %s17, 0
    %p85 = por %p83, %p84
    %p86 = scmp.ne.s32.totalorder %s74, %s75
    %p87 = scmp.eq.s32.totalorder %s18, 1
    %p88 = por %p86, %p87
    %p90 = scmp.ne.s32.totalorder %s75, %s89
    %p91 = scmp.eq.s32.totalorder %s18, 0
    %p92 = por %p90, %p91
    %s94 = sadd.s32 %s93, 1
    %p97 = scmp.eq.s32.totalorder %s12, 1
    %p98 = scmp.ne.s32.totalorder %s93, %s95
    %p99 = scmp.eq.s32.totalorder %s12, 0
    %p100 = por %p98, %p99
    %p101 = scmp.ne.s32.totalorder %s93, %s95
    %p102 = scmp.eq.s32.totalorder %s17, 1
    %p103 = por %p101, %p102
    %p104 = scmp.ne.s32.totalorder %s95, %s96
    %p105 = scmp.eq.s32.totalorder %s17, 0
    %p106 = por %p104, %p105
    %p107 = scmp.ne.s32.totalorder %s95, %s96
    %p108 = scmp.eq.s32.totalorder %s18, 1
    %p109 = por %p107, %p108
    %p111 = scmp.ne.s32.totalorder %s96, %s110
    %p112 = scmp.eq.s32.totalorder %s18, 0
    %p113 = por %p111, %p112
    %s115 = sadd.s32 %s114, 1
    %p118 = scmp.eq.s32.totalorder %s12, 1
    %p119 = scmp.ne.s32.totalorder %s114, %s116
    %p120 = scmp.eq.s32.totalorder %s12, 0
    %p121 = por %p119, %p120
    %p122 = scmp.ne.s32.totalorder %s114, %s116
    %p123 = scmp.eq.s32.totalorder %s17, 1
    %p124 = por %p122, %p123
    %p125 = scmp.ne.s32.totalorder %s116, %s117
    %p126 = scmp.eq.s32.totalorder %s17, 0
    %p127 = por %p125, %p126
    %p128 = scmp.ne.s32.totalorder %s116, %s117
    %p129 = scmp.eq.s32.totalorder %s18, 1
    %p130 = por %p128, %p129
    %p132 = scmp.ne.s32.totalorder %s117, %s131
    %p133 = scmp.eq.s32.totalorder %s18, 0
    %p134 = por %p132, %p133
    %s136 = sadd.s32 %s135, 1
    %p139 = scmp.eq.s32.totalorder %s12, 1
    %p140 = scmp.ne.s32.totalorder %s135, %s137
    %p141 = scmp.eq.s32.totalorder %s12, 0
    %p142 = por %p140, %p141
    %p143 = scmp.ne.s32.totalorder %s135, %s137
    %p144 = scmp.eq.s32.totalorder %s17, 1
    %p145 = por %p143, %p144
    %p146 = scmp.ne.s32.totalorder %s137, %s138
    %p147 = scmp.eq.s32.totalorder %s17, 0
    %p148 = por %p146, %p147
    %p149 = scmp.ne.s32.totalorder %s137, %s138
    %p150 = scmp.eq.s32.totalorder %s18, 1
    %p151 = por %p149, %p150
    %p153 = scmp.ne.s32.totalorder %s138, %s152
    %p154 = scmp.eq.s32.totalorder %s18, 0
    %p155 = por %p153, %p154
    %s156 = ssub.s32 %s12, %s19
    %p157 = scmp.eq.s32.totalorder %s156, 0
    %s159 = sadd.s32 %s158, 1
    %s160 = scalar_select %p157, %s158, %s159
    %p163 = pneg %p157
    %p164 = scmp.eq.s32.totalorder %s12, 1
    %p165 = por %p163, %p164
    %p166 = scmp.ne.s32.totalorder %s158, %s161
    %p167 = scmp.eq.s32.totalorder %s12, 0
    %p168 = por %p166, %p167
    %p169 = scmp.ne.s32.totalorder %s158, %s161
    %p170 = scmp.eq.s32.totalorder %s17, 1
    %p171 = por %p169, %p170
    %p172 = scmp.ne.s32.totalorder %s161, %s162
    %p173 = scmp.eq.s32.totalorder %s17, 0
    %p174 = por %p172, %p173
    %p175 = scmp.ne.s32.totalorder %s161, %s162
    %p176 = scmp.eq.s32.totalorder %s18, 1
    %p177 = por %p175, %p176
    %p179 = scmp.ne.s32.totalorder %s162, %s178
    %p180 = scmp.eq.s32.totalorder %s18, 0
    %p181 = por %p179, %p180
    %p182 = scmp.le.s32.totalorder 1, %s12
    %p183 = scmp.lt.s32.totalorder %s12, 3
    %p184 = pnand %p182, %p183
    %p185 = pneg %p184
    // Predicated region
    $region9: #{bicodec_vocoder_forward.1} parent=5 // pred_check
      _
    $region10: #{bicodec_vocoder_forward.1} parent=5 // pred_check_branch
      %187 = sbr.rel (%p184) target = $region12
    $region11: #{bicodec_vocoder_forward.1} parent=5 // pred_region
      %s188 = ssub.s32 %s12, 1
      // Predicated region
      $region13: #{bicodec_vocoder_forward.1} parent=11 // pred_check
        %p189 = pneg %p85
      $region14: #{bicodec_vocoder_forward.1} parent=11 // pred_check_branch
        %191 = sbr.rel (%p189) target = $region16
      $region15: #{bicodec_vocoder_forward.1} parent=11 // pred_region
        _
      $region16: #{bicodec_vocoder_forward.1} parent=11 // pred_fallthru
        _
      // Predicated region
      $region17: #{bicodec_vocoder_forward.1} parent=11 // pred_check
        %p192 = pneg %p106
      $region18: #{bicodec_vocoder_forward.1} parent=11 // pred_check_branch
        %194 = sbr.rel (%p192) target = $region20
      $region19: #{bicodec_vocoder_forward.1} parent=11 // pred_region
        _
      $region20: #{bicodec_vocoder_forward.1} parent=11 // pred_fallthru
        _
      // Predicated region
      $region21: #{bicodec_vocoder_forward.1} parent=11 // pred_check
        %p195 = pneg %p127
      $region22: #{bicodec_vocoder_forward.1} parent=11 // pred_check_branch
        %197 = sbr.rel (%p195) target = $region24
      $region23: #{bicodec_vocoder_forward.1} parent=11 // pred_region
        _
      $region24: #{bicodec_vocoder_forward.1} parent=11 // pred_fallthru
        _
      // Predicated region
      $region25: #{bicodec_vocoder_forward.1} parent=11 // pred_check
        %p198 = pneg %p148
      $region26: #{bicodec_vocoder_forward.1} parent=11 // pred_check_branch
        %200 = sbr.rel (%p198) target = $region28
      $region27: #{bicodec_vocoder_forward.1} parent=11 // pred_region
        _
      $region28: #{bicodec_vocoder_forward.1} parent=11 // pred_fallthru
        _
    $region12: #{bicodec_vocoder_forward.1} parent=5 // pred_fallthru
      _
    %p201 = scmp.lt.s32.totalorder %s12, 2
    // Predicated region
    $region29: #{bicodec_vocoder_forward.1} parent=5 // pred_check
      %p202 = pneg %p201
    $region30: #{bicodec_vocoder_forward.1} parent=5 // pred_check_branch
      %204 = sbr.rel (%p202) target = $region32
    $region31: #{bicodec_vocoder_forward.1} parent=5 // pred_region
      // Predicated region
      $region33: #{bicodec_vocoder_forward.1} parent=31 // pred_check
        %p205 = pneg %p32
      $region34: #{bicodec_vocoder_forward.1} parent=31 // pred_check_branch
        %207 = sbr.rel (%p205) target = $region36
      $region35: #{bicodec_vocoder_forward.1} parent=31 // pred_region
        %p208 = scmp.lt.s32.totalorder %s12, 1
        %s209 = scalar_select %p208, %s12, 1
        %s210 = smul.addr %s209, 8
        %s211 = smul.addr %s210, 4
        %s212 = scalar_lea.vmem %s0, %s211
      $region36: #{bicodec_vocoder_forward.1} parent=31 // pred_fallthru
        _
      // Predicated region
      $region37: #{bicodec_vocoder_forward.1} parent=31 // pred_check
        %p213 = pneg %p58
      $region38: #{bicodec_vocoder_forward.1} parent=31 // pred_check_branch
        %215 = sbr.rel (%p213) target = $region40
      $region39: #{bicodec_vocoder_forward.1} parent=31 // pred_region
        %p216 = scmp.lt.s32.totalorder %s12, 1
        %s217 = scalar_select %p216, %s12, 1
        %s218 = smul.addr %s217, 4
        %s219 = smul.addr %s218, 8
        %s220 = scalar_lea.vmem %s1, %s219
      $region40: #{bicodec_vocoder_forward.1} parent=31 // pred_fallthru
        _
    $region32: #{bicodec_vocoder_forward.1} parent=5 // pred_fallthru
      _
    %p221 = scmp.le.s32.totalorder 1, %s12
    %p222 = scmp.lt.s32.totalorder %s12, 3
    %p223 = pnand %p221, %p222
    %p224 = pneg %p223
    // Predicated region
    $region41: #{bicodec_vocoder_forward.1} parent=5 // pred_check
      _
    $region42: #{bicodec_vocoder_forward.1} parent=5 // pred_check_branch
      %226 = sbr.rel (%p223) target = $region44
    $region43: #{bicodec_vocoder_forward.1} parent=5 // pred_region
      %s227 = ssub.s32 %s12, 1
      %p228 = scmp.lt.s32.totalorder %s17, 1
      %s229 = scalar_select %p228, %s17, 1
      %s230 = smul.addr %s229, 8
      %s231 = smul.addr %s230, 4
      %s232 = scalar_lea.vmem %s0, %s231
      %p233 = pneg %p38
      %p234 = pneg %p35
      %p235 = scmp.lt.s32.totalorder %s17, 1
      %s236 = scalar_select %p235, %s17, 1
      %s237 = smul.addr %s236, 4
      %s238 = smul.addr %s237, 8
      %s239 = scalar_lea.vmem %s1, %s238
      %p240 = pneg %p64
      %p241 = pneg %p61
      %p242 = pneg %p85
      %p243 = pneg %p82
      %p244 = pneg %p106
      %p245 = pneg %p103
      %p246 = pneg %p127
      %p247 = pneg %p124
      %p248 = pneg %p148
      %p249 = pneg %p145
      %p250 = pneg %p174
      %p251 = pneg %p171
      %p252 = scmp.lt.s32.totalorder %s17, 1
      %s253 = scalar_select %p252, %s17, 1
      %s254 = smul.addr %s253, 2
      %s255 = scalar_lea.vmem %s6, %s254
      %p256 = scmp.lt.s32.totalorder %s17, 1
      %s257 = scalar_select %p256, %s17, 1
      %s258 = smul.addr %s257, 8
      %s259 = smul.addr %s258, 4
      %s260 = scalar_lea.vmem %s0, %s259
      %p261 = scmp.lt.s32.totalorder %s17, 1
      %s262 = scalar_select %p261, %s17, 1
      %s263 = smul.addr %s262, 4
      %s264 = smul.addr %s263, 8
      %s265 = scalar_lea.vmem %s1, %s264
      %p266 = scmp.lt.s32.totalorder %s17, 1
      %s267 = scalar_select %p266, %s17, 1
      %s268 = smul.addr %s267, 2
      %s269 = scalar_lea.vmem %s6, %s268
      %v271 = vld [vmem:[%s260] sm:$0xff]
      %v272 = vld [vmem:[%s260 + $0x8] sm:$0xff]
      %v273 = vld [vmem:[%s260 + $0x10] sm:$0xff]
      %v274 = vld [vmem:[%s260 + $0x18] sm:$0xff]
      %v275 = vld [vmem:[%s265] sm:$0xff]
      %v276 = vld [vmem:[%s265 + $0x8] sm:$0xff]
      %v277 = vld [vmem:[%s265 + $0x10] sm:$0xff]
      %v278 = vld [vmem:[%s265 + $0x18] sm:$0xff]
      %v279 = vld [vmem:[%s5] sm:$0xff]
      %v280 = vld [vmem:[%s5 + $0x8] sm:$0xff]
      %v281 = vld [vmem:[%s5 + $0x10] sm:$0xff]
      %v282 = vld [vmem:[%s5 + $0x18] sm:$0xff]
      %v283 = vld [vmem:[%s5 + $0x20] sm:$0xff]
      %v284 = vld [vmem:[%s5 + $0x28] sm:$0xff]
      %v285 = vld [vmem:[%s5 + $0x30] sm:$0xff]
      %v286 = vld [vmem:[%s5 + $0x38] sm:$0xff]
      %v287 = vld [vmem:[%s5] sm:$0x1]
      %v292 = vunpack.c.l.b16 %v271
      %v293 = vunpack.c.l.b16 %v272
      %v294 = vunpack.c.l.b16 %v273
      %v295 = vunpack.c.l.b16 %v274
      %v296 = vpack.c.b16 %v293, %v292
      %v297 = vpack.c.b16 %v295, %v294
      %v300 = vunpack.c.h.b16 %v271
      %v301 = vunpack.c.h.b16 %v272
      %v302 = vunpack.c.h.b16 %v273
      %v303 = vunpack.c.h.b16 %v274
      %v304 = vpack.c.b16 %v301, %v300
      %v305 = vpack.c.b16 %v303, %v302
      %306 = vrot.lane.b32.xlu0 %v296, 127
      %v307 = vpop.permute.xlu0 %306
      %308 = vrot.lane.b32.xlu0 %v304, 127
      %v309 = vpop.permute.xlu0 %308
      %310 = vrot.lane.b32.xlu0 %v297, 127
      %v311 = vpop.permute.xlu0 %310
      %312 = vrot.lane.b32.xlu0 %v305, 127
      %v313 = vpop.permute.xlu0 %312
      %vm314 = vcmask 1039360
      %v315 = vsel %vm314, %v307, %v309
      %v316 = vsel %vm314, %v311, %v313
      %319 = vrot.lane.b32.xlu0 %v296, 126
      %v320 = vpop.permute.xlu0 %319
      %321 = vrot.lane.b32.xlu0 %v304, 126
      %v322 = vpop.permute.xlu0 %321
      %323 = vrot.lane.b32.xlu0 %v297, 126
      %v324 = vpop.permute.xlu0 %323
      %325 = vrot.lane.b32.xlu0 %v305, 126
      %v326 = vpop.permute.xlu0 %325
      %vm327 = vcmask 1031168
      %v328 = vsel %vm327, %v320, %v322
      %v329 = vsel %vm327, %v324, %v326
      %v332 = vld [vmem:[%s2] sm:$0xf]
      %v333 = vld [vmem:[%s2 + $0x4] sm:$0xf]
      %v334 = vld [vmem:[%s2 + $0x8] sm:$0xf]
      %v335 = vld [vmem:[%s2 + $0xc] sm:$0xf]
      %337 = vset.pattern.permute.xlu0 0
      %338 = vperm.xlu0 %337, %v279
      %v339 = vpop.permute.xlu0 %338
      %342 = vset.pattern.permute.xlu0 0
      %343 = vperm.xlu0 %342, %v280
      %v344 = vpop.permute.xlu0 %343
      %347 = vset.pattern.permute.xlu0 0
      %348 = vperm.xlu0 %347, %v281
      %v349 = vpop.permute.xlu0 %348
      %352 = vset.pattern.permute.xlu0 0
      %353 = vperm.xlu0 %352, %v282
      %v354 = vpop.permute.xlu0 %353
      %v360 = vunpack.c.l.b16 %v332
      %v361 = vunpack.c.l.b16 %v333
      %v362 = vunpack.c.l.b16 %v334
      %v363 = vunpack.c.l.b16 %v335
      %v364 = vpack.c.b16 %v361, %v360
      %v365 = vpack.c.b16 %v363, %v362
      %vm366 = vcmask 785408
      %v368 = vsel %vm366, %v364, 0
      %v371 = vsel %vm366, %v365, 0
      %373 = vmatpush.bf16.msra.mxu0 0
      %374 = vmatpush.bf16.msra.mxu0 0
      %375 = vmatpush.bf16.msra.mxu0 %v329
      %376 = vmatpush.bf16.msra.mxu0 %v328
      %377 = vmatpush.bf16.msra.mxu0 %v316
      %378 = vmatpush.bf16.msra.mxu0 %v315
      %379 = vmatpush.bf16.msra.mxu0 %v297
      %380 = vmatpush.bf16.msra.mxu0 %v296
      %381 = vmatmul.bf16.gmra.mxu0 %v368
      %v382 = vpop.f32.mrf.mxu0
      %v383 = vadd.f32 %v339, %v382
      %v384 = vpop.f32.mrf.mxu0
      %v385 = vadd.f32 %v344, %v384
      %386 = vmatmul.bf16.gmra.mxu0 %v371
      %v387 = vpop.f32.mrf.mxu0
      %v388 = vadd.f32 %v349, %v387
      %v389 = vpop.f32.mrf.mxu0
      %v390 = vadd.f32 %v354, %v389
      %391 = vdwg.mxu0
      %393 = vset.pattern.permute.xlu0 0
      %394 = vperm.xlu0 %393, %v275
      %v395 = vpop.permute.xlu0 %394
      %398 = vset.pattern.permute.xlu0 0
      %399 = vperm.xlu0 %398, %v276
      %v400 = vpop.permute.xlu0 %399
      %403 = vset.pattern.permute.xlu0 0
      %404 = vperm.xlu0 %403, %v277
      %v405 = vpop.permute.xlu0 %404
      %408 = vset.pattern.permute.xlu0 0
      %409 = vperm.xlu0 %408, %v278
      %v410 = vpop.permute.xlu0 %409
      %v412 = vadd.f32 %v383, %v395
      %v413 = vadd.f32 %v385, %v400
      %v414 = vadd.f32 %v388, %v405
      %v415 = vadd.f32 %v390, %v410
      %v416 = vtanh.pop %v412
      %v417 = vtanh.pop %v413
      %v418 = vtanh.pop %v414
      %v419 = vtanh.pop %v415
      %420 = vset.pattern.permute.xlu0 1
      %421 = vperm.xlu0 %420, %v275
      %v422 = vpop.permute.xlu0 %421
      %424 = vset.pattern.permute.xlu0 1
      %425 = vperm.xlu0 %424, %v276
      %v426 = vpop.permute.xlu0 %425
      %428 = vset.pattern.permute.xlu0 1
      %429 = vperm.xlu0 %428, %v277
      %v430 = vpop.permute.xlu0 %429
      %432 = vset.pattern.permute.xlu0 1
      %433 = vperm.xlu0 %432, %v278
      %v434 = vpop.permute.xlu0 %433
      %v436 = vadd.f32 %v416, %v422
      %v437 = vadd.f32 %v417, %v426
      %v438 = vadd.f32 %v418, %v430
      %v439 = vadd.f32 %v419, %v434
      %v440 = vlaneseq
      %v441 = vand.u32 %v440, 127
      %vm442 = vcmp.lt.s32.totalorder %v441, 8
      %v443 = vsel %vm442, %v436, 0.0
      %v444 = vsel %vm442, %v437, 0.0
      %v445 = vsel %vm442, %v438, 0.0
      %v446 = vsel %vm442, %v439, 0.0
      %vm447 = vcmask 3072
      %448 = vst.msk [vmem:[#allocation2] sm:$0xf] %vm447, 0
      %449 = vst.msk [vmem:[#allocation2 + $0x8] sm:$0xf] %vm447, 0
      %450 = vst.msk [vmem:[#allocation2 + $0x10] sm:$0xf] %vm447, 0
      %451 = vst.msk [vmem:[#allocation2 + $0x18] sm:$0xf] %vm447, 0
      %vm452 = vcmask 11272
      %453 = vst.msk [vmem:[#allocation2 + $0x4] sm:$0xf] %vm452, 0
      %454 = vst.msk [vmem:[#allocation2 + $0xc] sm:$0xf] %vm452, 0
      %455 = vst.msk [vmem:[#allocation2 + $0x14] sm:$0xf] %vm452, 0
      %456 = vst.msk [vmem:[#allocation2 + $0x1c] sm:$0xf] %vm452, 0
      %v457 = vpack.c.bf16 %v443, %v443
      %v458 = vpack.c.bf16 %v444, %v444
      %v459 = vpack.c.bf16 %v445, %v445
      %v460 = vpack.c.bf16 %v446, %v446
      %465 = vrot.lane.b32.xlu0 %v457, 1
      %v466 = vpop.permute.xlu0 %465
      %467 = vrot.lane.b32.xlu0 %v458, 1
      %v468 = vpop.permute.xlu0 %467
      %469 = vrot.lane.b32.xlu0 %v459, 1
      %v470 = vpop.permute.xlu0 %469
      %471 = vrot.lane.b32.xlu0 %v460, 1
      %v472 = vpop.permute.xlu0 %471
      %v473 = vrot.slane %v466, 4
      %v474 = vrot.slane %v468, 4
      %v475 = vrot.slane %v470, 4
      %v476 = vrot.slane %v472, 4
      %vm477 = vcmask 7168
      %v478 = vsel %vm477, %v473, %v466
      %v479 = vsel %vm477, %v474, %v468
      %v480 = vsel %vm477, %v475, %v470
      %v481 = vsel %vm477, %v476, %v472
      %vm486 = vcmask 1043464
      %vm487 = vcmask 7172
      %vm488 = vmor %vm487, %vm486
      %489 = vst.msk [vmem:[#allocation2] sm:$0xff] %vm488, %v478
      %490 = vst.msk [vmem:[#allocation2 + $0x8] sm:$0xff] %vm488, %v479
      %491 = vst.msk [vmem:[#allocation2 + $0x10] sm:$0xff] %vm488, %v480
      %492 = vst.msk [vmem:[#allocation2 + $0x18] sm:$0xff] %vm488, %v481
      %v493 = vld [vmem:[#allocation2] sm:$0xf]
      %v494 = vld [vmem:[#allocation2 + $0x8] sm:$0xf]
      %v495 = vld [vmem:[#allocation2 + $0x10] sm:$0xf]
      %v496 = vld [vmem:[#allocation2 + $0x18] sm:$0xf]
      %v497 = vld [vmem:[#allocation2] sm:$0xff]
      %v498 = vld [vmem:[#allocation2 + $0x8] sm:$0xff]
      %v499 = vld [vmem:[#allocation2 + $0x10] sm:$0xff]
      %v500 = vld [vmem:[#allocation2 + $0x18] sm:$0xff]
      %v505 = vunpack.c.l.b16 %v493
      %v506 = vunpack.c.l.b16 %v494
      %v507 = vunpack.c.l.b16 %v495
      %v508 = vunpack.c.l.b16 %v496
      %v509 = vpack.c.b16 %v506, %v505
      %v510 = vpack.c.b16 %v508, %v507
      %v517 = vunpack.c.l.b16 %v497
      %v518 = vunpack.c.h.b16 %v497
      %v519 = vunpack.c.l.b16 %v498
      %v520 = vunpack.c.h.b16 %v498
      %v521 = vunpack.c.l.b16 %v499
      %v522 = vunpack.c.h.b16 %v499
      %v523 = vunpack.c.l.b16 %v500
      %v524 = vunpack.c.h.b16 %v500
      %v525 = vpack.c.b16 %v519, %v517
      %v526 = vpack.c.b16 %v520, %v518
      %v527 = vpack.c.b16 %v523, %v521
      %v528 = vpack.c.b16 %v524, %v522
      %529 = vrot.lane.b32.xlu0 %v525, 127
      %v530 = vpop.permute.xlu0 %529
      %531 = vrot.lane.b32.xlu0 %v526, 127
      %v532 = vpop.permute.xlu0 %531
      %533 = vrot.lane.b32.xlu0 %v527, 127
      %v534 = vpop.permute.xlu0 %533
      %535 = vrot.lane.b32.xlu0 %v528, 127
      %v536 = vpop.permute.xlu0 %535
      %v537 = vsel %vm314, %v530, %v532
      %v538 = vsel %vm314, %v534, %v536
      %541 = vrot.lane.b32.xlu0 %v525, 126
      %v542 = vpop.permute.xlu0 %541
      %543 = vrot.lane.b32.xlu0 %v526, 126
      %v544 = vpop.permute.xlu0 %543
      %545 = vrot.lane.b32.xlu0 %v527, 126
      %v546 = vpop.permute.xlu0 %545
      %547 = vrot.lane.b32.xlu0 %v528, 126
      %v548 = vpop.permute.xlu0 %547
      %v549 = vsel %vm327, %v542, %v544
      %v550 = vsel %vm327, %v546, %v548
      %v553 = vld [vmem:[%s3] sm:$0xf]
      %v554 = vld [vmem:[%s3 + $0x4] sm:$0xf]
      %v555 = vld [vmem:[%s3 + $0x8] sm:$0xf]
      %v556 = vld [vmem:[%s3 + $0xc] sm:$0xf]
      %v557 = vld [vmem:[%s3 + $0x10] sm:$0xf]
      %v558 = vld [vmem:[%s3 + $0x14] sm:$0xf]
      %v559 = vld [vmem:[%s3 + $0x18] sm:$0xf]
      %v560 = vld [vmem:[%s3 + $0x1c] sm:$0xf]
      %561 = vset.pattern.permute.xlu0 1
      %562 = vperm.xlu0 %561, %v279
      %v563 = vpop.permute.xlu0 %562
      %565 = vset.pattern.permute.xlu0 1
      %566 = vperm.xlu0 %565, %v280
      %v567 = vpop.permute.xlu0 %566
      %569 = vset.pattern.permute.xlu0 1
      %570 = vperm.xlu0 %569, %v281
      %v571 = vpop.permute.xlu0 %570
      %573 = vset.pattern.permute.xlu0 1
      %574 = vperm.xlu0 %573, %v282
      %v575 = vpop.permute.xlu0 %574
      %578 = vset.pattern.permute.xlu0 1
      %579 = vperm.xlu0 %578, %v283
      %v580 = vpop.permute.xlu0 %579
      %583 = vset.pattern.permute.xlu0 1
      %584 = vperm.xlu0 %583, %v284
      %v585 = vpop.permute.xlu0 %584
      %588 = vset.pattern.permute.xlu0 1
      %589 = vperm.xlu0 %588, %v285
      %v590 = vpop.permute.xlu0 %589
      %593 = vset.pattern.permute.xlu0 1
      %594 = vperm.xlu0 %593, %v286
      %v595 = vpop.permute.xlu0 %594
      %v605 = vunpack.c.l.b16 %v553
      %v606 = vunpack.c.l.b16 %v554
      %v607 = vunpack.c.l.b16 %v555
      %v608 = vunpack.c.l.b16 %v556
      %v609 = vunpack.c.l.b16 %v557
      %v610 = vunpack.c.l.b16 %v558
      %v611 = vunpack.c.l.b16 %v559
      %v612 = vunpack.c.l.b16 %v560
      %v613 = vpack.c.b16 %v606, %v605
      %v614 = vpack.c.b16 %v608, %v607
      %v615 = vpack.c.b16 %v610, %v609
      %v616 = vpack.c.b16 %v612, %v611
      %v618 = vsel %vm366, %v613, 0
      %v621 = vsel %vm366, %v614, 0
      %v624 = vsel %vm366, %v615, 0
      %v627 = vsel %vm366, %v616, 0
      %629 = vmatpush.bf16.msra.mxu0 0
      %630 = vmatpush.bf16.msra.mxu0 0
      %631 = vmatpush.bf16.msra.mxu0 %v550
      %632 = vmatpush.bf16.msra.mxu0 %v549
      %633 = vmatpush.bf16.msra.mxu0 %v538
      %634 = vmatpush.bf16.msra.mxu0 %v537
      %635 = vmatpush.bf16.msra.mxu0 %v510
      %636 = vmatpush.bf16.msra.mxu0 %v509
      %637 = vmatmul.bf16.gmra.mxu0 %v618
      %v638 = vpop.f32.mrf.mxu0
      %v639 = vadd.f32 %v563, %v638
      %v640 = vpop.f32.mrf.mxu0
      %v641 = vadd.f32 %v567, %v640
      %642 = vmatmul.bf16.gmra.mxu0 %v621
      %v643 = vpop.f32.mrf.mxu0
      %v644 = vadd.f32 %v571, %v643
      %v645 = vpop.f32.mrf.mxu0
      %v646 = vadd.f32 %v575, %v645
      %647 = vmatmul.bf16.gmra.mxu0 %v624
      %v648 = vpop.f32.mrf.mxu0
      %v649 = vadd.f32 %v580, %v648
      %v650 = vpop.f32.mrf.mxu0
      %v651 = vadd.f32 %v585, %v650
      %652 = vmatmul.bf16.gmra.mxu0 %v627
      %v653 = vpop.f32.mrf.mxu0
      %v654 = vadd.f32 %v590, %v653
      %v655 = vpop.f32.mrf.mxu0
      %v656 = vadd.f32 %v595, %v655
      %657 = vdwg.mxu0
      %vm658 = vcmp.ge.f32.partialorder %v639, 0.0
      %vm659 = vcmp.ge.f32.partialorder %v641, 0.0
      %vm660 = vcmp.ge.f32.partialorder %v644, 0.0
      %vm661 = vcmp.ge.f32.partialorder %v646, 0.0
      %vm662 = vcmp.ge.f32.partialorder %v649, 0.0
      %vm663 = vcmp.ge.f32.partialorder %v651, 0.0
      %vm664 = vcmp.ge.f32.partialorder %v654, 0.0
      %vm665 = vcmp.ge.f32.partialorder %v656, 0.0
      %v666 = vmul.f32 %v639, 0.1
      %v667 = vmul.f32 %v641, 0.1
      %v668 = vmul.f32 %v644, 0.1
      %v669 = vmul.f32 %v646, 0.1
      %v670 = vmul.f32 %v649, 0.1
      %v671 = vmul.f32 %v651, 0.1
      %v672 = vmul.f32 %v654, 0.1
      %v673 = vmul.f32 %v656, 0.1
      %v674 = vsel %vm658, %v639, %v666
      %v675 = vsel %vm659, %v641, %v667
      %v676 = vsel %vm660, %v644, %v668
      %v677 = vsel %vm661, %v646, %v669
      %v678 = vsel %vm662, %v649, %v670
      %v679 = vsel %vm663, %v651, %v671
      %v680 = vsel %vm664, %v654, %v672
      %v681 = vsel %vm665, %v656, %v673
      %v682 = vsel %vm442, %v674, 0.0
      %v683 = vsel %vm442, %v675, 0.0
      %v684 = vsel %vm442, %v676, 0.0
      %v685 = vsel %vm442, %v677, 0.0
      %v686 = vsel %vm442, %v678, 0.0
      %v687 = vsel %vm442, %v679, 0.0
      %v688 = vsel %vm442, %v680, 0.0
      %v689 = vsel %vm442, %v681, 0.0
      %vm690 = vcmask 11264
      %691 = vst.msk [vmem:[#allocation3] sm:$0xf] %vm690, 0
      %692 = vst.msk [vmem:[#allocation3 + $0x8] sm:$0xf] %vm690, 0
      %693 = vst.msk [vmem:[#allocation3 + $0x10] sm:$0xf] %vm690, 0
      %694 = vst.msk [vmem:[#allocation3 + $0x18] sm:$0xf] %vm690, 0
      %695 = vst.msk [vmem:[#allocation3 + $0x20] sm:$0xf] %vm690, 0
      %696 = vst.msk [vmem:[#allocation3 + $0x28] sm:$0xf] %vm690, 0
      %697 = vst.msk [vmem:[#allocation3 + $0x30] sm:$0xf] %vm690, 0
      %698 = vst.msk [vmem:[#allocation3 + $0x38] sm:$0xf] %vm690, 0
      %vm699 = vcmask 27664
      %700 = vst.msk [vmem:[#allocation3 + $0x4] sm:$0xf] %vm699, 0
      %701 = vst.msk [vmem:[#allocation3 + $0xc] sm:$0xf] %vm699, 0
      %702 = vst.msk [vmem:[#allocation3 + $0x14] sm:$0xf] %vm699, 0
      %703 = vst.msk [vmem:[#allocation3 + $0x1c] sm:$0xf] %vm699, 0
      %704 = vst.msk [vmem:[#allocation3 + $0x24] sm:$0xf] %vm699, 0
      %705 = vst.msk [vmem:[#allocation3 + $0x2c] sm:$0xf] %vm699, 0
      %706 = vst.msk [vmem:[#allocation3 + $0x34] sm:$0xf] %vm699, 0
      %707 = vst.msk [vmem:[#allocation3 + $0x3c] sm:$0xf] %vm699, 0
      %v708 = vpack.c.bf16 %v682, %v682
      %v709 = vpack.c.bf16 %v683, %v683
      %v710 = vpack.c.bf16 %v684, %v684
      %v711 = vpack.c.bf16 %v685, %v685
      %v712 = vpack.c.bf16 %v686, %v686
      %v713 = vpack.c.bf16 %v687, %v687
      %v714 = vpack.c.bf16 %v688, %v688
      %v715 = vpack.c.bf16 %v689, %v689
      %724 = vrot.lane.b32.xlu0 %v708, 2
      %v725 = vpop.permute.xlu0 %724
      %726 = vrot.lane.b32.xlu0 %v709, 2
      %v727 = vpop.permute.xlu0 %726
      %728 = vrot.lane.b32.xlu0 %v710, 2
      %v729 = vpop.permute.xlu0 %728
      %730 = vrot.lane.b32.xlu0 %v711, 2
      %v731 = vpop.permute.xlu0 %730
      %732 = vrot.lane.b32.xlu0 %v712, 2
      %v733 = vpop.permute.xlu0 %732
      %734 = vrot.lane.b32.xlu0 %v713, 2
      %v735 = vpop.permute.xlu0 %734
      %736 = vrot.lane.b32.xlu0 %v714, 2
      %v737 = vpop.permute.xlu0 %736
      %738 = vrot.lane.b32.xlu0 %v715, 2
      %v739 = vpop.permute.xlu0 %738
      %v740 = vrot.slane %v725, 4
      %v741 = vrot.slane %v727, 4
      %v742 = vrot.slane %v729, 4
      %v743 = vrot.slane %v731, 4
      %v744 = vrot.slane %v733, 4
      %v745 = vrot.slane %v735, 4
      %v746 = vrot.slane %v737, 4
      %v747 = vrot.slane %v739, 4
      %vm748 = vcmask 15360
      %v749 = vsel %vm748, %v740, %v725
      %v750 = vsel %vm748, %v741, %v727
      %v751 = vsel %vm748, %v742, %v729
      %v752 = vsel %vm748, %v743, %v731
      %v753 = vsel %vm748, %v744, %v733
      %v754 = vsel %vm748, %v745, %v735
      %v755 = vsel %vm748, %v746, %v737
      %v756 = vsel %vm748, %v747, %v739
      %vm765 = vcmask 1043472
      %vm766 = vcmask 15364
      %vm767 = vmor %vm766, %vm765
      %768 = vst.msk [vmem:[#allocation3] sm:$0xff] %vm767, %v749
      %769 = vst.msk [vmem:[#allocation3 + $0x8] sm:$0xff] %vm767, %v750
      %770 = vst.msk [vmem:[#allocation3 + $0x10] sm:$0xff] %vm767, %v751
      %771 = vst.msk [vmem:[#allocation3 + $0x18] sm:$0xff] %vm767, %v752
      %772 = vst.msk [vmem:[#allocation3 + $0x20] sm:$0xff] %vm767, %v753
      %773 = vst.msk [vmem:[#allocation3 + $0x28] sm:$0xff] %vm767, %v754
      %774 = vst.msk [vmem:[#allocation3 + $0x30] sm:$0xff] %vm767, %v755
      %775 = vst.msk [vmem:[#allocation3 + $0x38] sm:$0xff] %vm767, %v756
      %v776 = vld [vmem:[#allocation3] sm:$0xff]
      %v777 = vld [vmem:[#allocation3 + $0x8] sm:$0xff]
      %v778 = vld [vmem:[#allocation3 + $0x10] sm:$0xff]
      %v779 = vld [vmem:[#allocation3 + $0x18] sm:$0xff]
      %v780 = vld [vmem:[#allocation3 + $0x20] sm:$0xf]
      %v781 = vld [vmem:[#allocation3 + $0x28] sm:$0xf]
      %v782 = vld [vmem:[#allocation3 + $0x30] sm:$0xf]
      %v783 = vld [vmem:[#allocation3 + $0x38] sm:$0xf]
      %v784 = vld [vmem:[#allocation3 + $0x20] sm:$0xff]
      %v785 = vld [vmem:[#allocation3 + $0x28] sm:$0xff]
      %v786 = vld [vmem:[#allocation3 + $0x30] sm:$0xff]
      %v787 = vld [vmem:[#allocation3 + $0x38] sm:$0xff]
      %v792 = vunpack.c.l.b16 %v776
      %v793 = vunpack.c.h.b16 %v776
      %v794 = vunpack.c.l.b16 %v777
      %v795 = vunpack.c.h.b16 %v777
      %v796 = vunpack.c.l.b16 %v778
      %v797 = vunpack.c.h.b16 %v778
      %v798 = vunpack.c.l.b16 %v779
      %v799 = vunpack.c.h.b16 %v779
      %v800 = vpack.c.b16 %v794, %v792
      %v801 = vpack.c.b16 %v795, %v793
      %v802 = vpack.c.b16 %v798, %v796
      %v803 = vpack.c.b16 %v799, %v797
      %804 = vrot.lane.b32.xlu0 %v800, 127
      %v805 = vpop.permute.xlu0 %804
      %806 = vrot.lane.b32.xlu0 %v801, 127
      %v807 = vpop.permute.xlu0 %806
      %808 = vrot.lane.b32.xlu0 %v802, 127
      %v809 = vpop.permute.xlu0 %808
      %810 = vrot.lane.b32.xlu0 %v803, 127
      %v811 = vpop.permute.xlu0 %810
      %v812 = vsel %vm314, %v805, %v807
      %v813 = vsel %vm314, %v809, %v811
      %814 = vrot.lane.b32.xlu0 %v800, 126
      %v815 = vpop.permute.xlu0 %814
      %816 = vrot.lane.b32.xlu0 %v801, 126
      %v817 = vpop.permute.xlu0 %816
      %818 = vrot.lane.b32.xlu0 %v802, 126
      %v819 = vpop.permute.xlu0 %818
      %820 = vrot.lane.b32.xlu0 %v803, 126
      %v821 = vpop.permute.xlu0 %820
      %v822 = vsel %vm327, %v815, %v817
      %v823 = vsel %vm327, %v819, %v821
      %824 = vrot.lane.b32.xlu0 %v800, 125
      %v825 = vpop.permute.xlu0 %824
      %826 = vrot.lane.b32.xlu0 %v801, 125
      %v827 = vpop.permute.xlu0 %826
      %828 = vrot.lane.b32.xlu0 %v802, 125
      %v829 = vpop.permute.xlu0 %828
      %830 = vrot.lane.b32.xlu0 %v803, 125
      %v831 = vpop.permute.xlu0 %830
      %vm832 = vcmask 1022976
      %v833 = vsel %vm832, %v825, %v827
      %v834 = vsel %vm832, %v829, %v831
      %v839 = vunpack.c.l.b16 %v780
      %v840 = vunpack.c.l.b16 %v781
      %v841 = vunpack.c.l.b16 %v782
      %v842 = vunpack.c.l.b16 %v783
      %v843 = vpack.c.b16 %v840, %v839
      %v844 = vpack.c.b16 %v842, %v841
      %845 = vrot.lane.b32.xlu0 %v843, 1
      %v846 = vpop.permute.xlu0 %845
      %847 = vrot.lane.b32.xlu0 %v844, 1
      %v848 = vpop.permute.xlu0 %847
      %v853 = vunpack.c.l.b16 %v784
      %v854 = vunpack.c.h.b16 %v784
      %v855 = vunpack.c.l.b16 %v785
      %v856 = vunpack.c.h.b16 %v785
      %v857 = vunpack.c.l.b16 %v786
      %v858 = vunpack.c.h.b16 %v786
      %v859 = vunpack.c.l.b16 %v787
      %v860 = vunpack.c.h.b16 %v787
      %v861 = vpack.c.b16 %v855, %v853
      %v862 = vpack.c.b16 %v856, %v854
      %v863 = vpack.c.b16 %v859, %v857
      %v864 = vpack.c.b16 %v860, %v858
      %865 = vrot.lane.b32.xlu0 %v861, 127
      %v866 = vpop.permute.xlu0 %865
      %867 = vrot.lane.b32.xlu0 %v862, 127
      %v868 = vpop.permute.xlu0 %867
      %869 = vrot.lane.b32.xlu0 %v863, 127
      %v870 = vpop.permute.xlu0 %869
      %871 = vrot.lane.b32.xlu0 %v864, 127
      %v872 = vpop.permute.xlu0 %871
      %v873 = vsel %vm314, %v866, %v868
      %v874 = vsel %vm314, %v870, %v872
      %875 = vrot.lane.b32.xlu0 %v861, 126
      %v876 = vpop.permute.xlu0 %875
      %877 = vrot.lane.b32.xlu0 %v862, 126
      %v878 = vpop.permute.xlu0 %877
      %879 = vrot.lane.b32.xlu0 %v863, 126
      %v880 = vpop.permute.xlu0 %879
      %881 = vrot.lane.b32.xlu0 %v864, 126
      %v882 = vpop.permute.xlu0 %881
      %v883 = vsel %vm327, %v876, %v878
      %v884 = vsel %vm327, %v880, %v882
      %v885 = vld [vmem:[%s4] sm:$0x3]
      %887 = vrot.lane.b32.xlu0 %v287, 126
      %v888 = vpop.permute.xlu0 %887
      %s889 = vtos %v888
      %v890 = vstv %s889
      %893 = vst [vmem:[#allocation1] ss:$9 sm:$0xff] %v885
      %v894 = vld [vmem:[#allocation1] sm:$0xff]
      %v895 = vld [vmem:[#allocation1 + $0x9] sm:$0xff]
      %898 = vrot.lane.b32.xlu0 %v812, 127
      %v899 = vpop.permute.xlu0 %898
      %900 = vrot.lane.b32.xlu0 %v807, 127
      %v901 = vpop.permute.xlu0 %900
      %902 = vrot.lane.b32.xlu0 %v813, 127
      %v903 = vpop.permute.xlu0 %902
      %904 = vrot.lane.b32.xlu0 %v811, 127
      %v905 = vpop.permute.xlu0 %904
      %906 = vrot.lane.b32.xlu0 %v822, 127
      %v907 = vpop.permute.xlu0 %906
      %908 = vrot.lane.b32.xlu0 %v817, 127
      %v909 = vpop.permute.xlu0 %908
      %910 = vrot.lane.b32.xlu0 %v823, 127
      %v911 = vpop.permute.xlu0 %910
      %912 = vrot.lane.b32.xlu0 %v821, 127
      %v913 = vpop.permute.xlu0 %912
      %914 = vrot.lane.b32.xlu0 %v833, 127
      %v915 = vpop.permute.xlu0 %914
      %916 = vrot.lane.b32.xlu0 %v827, 127
      %v917 = vpop.permute.xlu0 %916
      %918 = vrot.lane.b32.xlu0 %v834, 127
      %v919 = vpop.permute.xlu0 %918
      %920 = vrot.lane.b32.xlu0 %v831, 127
      %v921 = vpop.permute.xlu0 %920
      %922 = vrot.lane.b32.xlu0 %v846, 127
      %v923 = vpop.permute.xlu0 %922
      %924 = vrot.lane.b32.xlu0 %v848, 127
      %v925 = vpop.permute.xlu0 %924
      %926 = vrot.lane.b32.xlu0 %v873, 127
      %v927 = vpop.permute.xlu0 %926
      %928 = vrot.lane.b32.xlu0 %v868, 127
      %v929 = vpop.permute.xlu0 %928
      %930 = vrot.lane.b32.xlu0 %v874, 127
      %v931 = vpop.permute.xlu0 %930
      %932 = vrot.lane.b32.xlu0 %v872, 127
      %v933 = vpop.permute.xlu0 %932
      %934 = vrot.lane.b32.xlu0 %v883, 127
      %v935 = vpop.permute.xlu0 %934
      %936 = vrot.lane.b32.xlu0 %v878, 127
      %v937 = vpop.permute.xlu0 %936
      %938 = vrot.lane.b32.xlu0 %v884, 127
      %v939 = vpop.permute.xlu0 %938
      %940 = vrot.lane.b32.xlu0 %v882, 127
      %v941 = vpop.permute.xlu0 %940
      %v942 = vsel %vm314, %v899, %v901
      %v943 = vsel %vm314, %v903, %v905
      %v944 = vsel %vm314, %v907, %v909
      %v945 = vsel %vm314, %v911, %v913
      %v946 = vsel %vm314, %v915, %v917
      %v947 = vsel %vm314, %v919, %v921
      %v948 = vsel %vm314, %v927, %v929
      %v949 = vsel %vm314, %v931, %v933
      %v950 = vsel %vm314, %v935, %v937
      %v951 = vsel %vm314, %v939, %v941
      %968 = vmatpush.bf16.msra.mxu0 %v947
      %969 = vmatpush.bf16.msra.mxu0 %v946
      %970 = vmatpush.bf16.msra.mxu0 %v945
      %971 = vmatpush.bf16.msra.mxu0 %v944
      %972 = vmatpush.bf16.msra.mxu0 %v943
      %973 = vmatpush.bf16.msra.mxu0 %v942
      %974 = vmatpush.bf16.msra.mxu0 %v813
      %975 = vmatpush.bf16.msra.mxu0 %v812
      %976 = vmatmul.bf16.gmra.mxu0 %v894
      %v977 = vpop.f32.mrf.mxu0
      %v978 = vadd.f32 %v890, %v977
      %v979 = vpop.f32.mrf.mxu0
      %980 = vdwg.mxu0
      %981 = vmatpush.bf16.msra.mxu0 %v951
      %982 = vmatpush.bf16.msra.mxu0 %v950
      %983 = vmatpush.bf16.msra.mxu0 %v949
      %984 = vmatpush.bf16.msra.mxu0 %v948
      %985 = vmatpush.bf16.msra.mxu0 %v874
      %986 = vmatpush.bf16.msra.mxu0 %v873
      %987 = vmatpush.bf16.msra.mxu0 %v925
      %988 = vmatpush.bf16.msra.mxu0 %v923
      %989 = vmatmul.bf16.gmra.mxu0 %v895
      %v990 = vpop.f32.mrf.mxu0
      %v991 = vadd.f32 %v978, %v990
      %v992 = vpop.f32.mrf.mxu0
      %993 = vdwg.mxu0
      %v994 = vtanh.pop %v991
      %995 = vst [vmem:[%s269] sm:$0x3] %v994
      %p996 = scmp.lt.s32.totalorder %s17, 1
      %s997 = scalar_select %p996, %s17, 1
      %s998 = smul.addr %s997, 2
      %s999 = scalar_lea.vmem %s6, %s998
      // Predicated region
      $region45: #{bicodec_vocoder_forward.1} parent=43 // pred_check
        %p1000 = pneg %p171
      $region46: #{bicodec_vocoder_forward.1} parent=43 // pred_check_branch
        %1002 = sbr.rel (%p1000) target = $region48
      $region47: #{bicodec_vocoder_forward.1} parent=43 // pred_region
        _
      $region48: #{bicodec_vocoder_forward.1} parent=43 // pred_fallthru
        _
    $region44: #{bicodec_vocoder_forward.1} parent=5 // pred_fallthru
      _
    %p1003 = scmp.le.s32.totalorder 2, %s12
    // Predicated region
    $region49: #{bicodec_vocoder_forward.1} parent=5 // pred_check
      %p1004 = pneg %p1003
    $region50: #{bicodec_vocoder_forward.1} parent=5 // pred_check_branch
      %1006 = sbr.rel (%p1004) target = $region52
    $region51: #{bicodec_vocoder_forward.1} parent=5 // pred_region
      %s1007 = ssub.s32 %s12, 2
      // Predicated region
      $region53: #{bicodec_vocoder_forward.1} parent=51 // pred_check
        %p1008 = pneg %p177
      $region54: #{bicodec_vocoder_forward.1} parent=51 // pred_check_branch
        %1010 = sbr.rel (%p1008) target = $region56
      $region55: #{bicodec_vocoder_forward.1} parent=51 // pred_region
        %p1011 = scmp.lt.s32.totalorder %s18, 1
        %s1012 = scalar_select %p1011, %s18, 1
        %s1013 = smul.addr %s1012, 2
        %s1014 = scalar_lea.vmem %s6, %s1013
      $region56: #{bicodec_vocoder_forward.1} parent=51 // pred_fallthru
        _
    $region52: #{bicodec_vocoder_forward.1} parent=5 // pred_fallthru
      _
  $region6: #{bicodec_vocoder_forward.1} parent=0 // loop_footer
    %s16 = sadd.s32 1, %s12
  $region7: #{bicodec_vocoder_forward.1} parent=0 // loop_footer_branch
    %11 = sbr.rel target = $region3
  $region8: #{bicodec_vocoder_forward.1} parent=0 // loop_exit
    _

</llo_original>
